<compile_context>
chip_gen: v7x
topology: tpu7x:2x2x1
jax: 0.10.0
libtpu: 0.0.40
codegen_flags: <defaults>
</compile_context>

<pallas_src>
import functools
import math

import jax
import jax.numpy as jnp
from jax.experimental import pallas as pl
from jax.experimental.pallas import tpu as pltpu

_LANE = 128
_LOG_2PI = math.log(2.0 * math.pi)
_VMEM_LIMIT_BYTES = 48 * 1024 * 1024    # explicit scoped-VMEM limit (fits v7x's 64 MiB)
_VMEM_BUDGET_BYTES = 40 * 1024 * 1024   # planning budget (headroom under the limit)


def _round_up(x, m):
    return (x + m - 1) // m * m


def _cdiv(a, b):
    return (a + b - 1) // b


def _actor_kernel(*refs, n_actions, evaluate, with_logprob, max_action,
                  min_log_std, max_log_std):
    """Fused MLP (2 hidden ReLU layers) + tanh-squashed Gaussian head.

    All activations are (features, TB): batch on the lane axis.
    Weights arrive already cast to the MXU input dtype; accumulation is f32.
    """
    need_eps = with_logprob or (not evaluate)
    if need_eps:
        (x_ref, eps_ref, w1_ref, b1_ref, w2_ref, b2_ref,
         wh_ref, bh_ref, out_ref) = refs
    else:
        (x_ref, w1_ref, b1_ref, w2_ref, b2_ref,
         wh_ref, bh_ref, out_ref) = refs

    A = n_actions

    def mm(w_ref, x):
        w = w_ref[...]                      # already matmul dtype (cast once in wrapper)
        return jnp.dot(w, x.astype(w.dtype), preferred_element_type=jnp.float32)

    x = x_ref[...]                                          # (n_states, TB)
    h1 = jnp.maximum(mm(w1_ref, x) + b1_ref[...], 0.0)      # (hidden, TB) f32
    h2 = jnp.maximum(mm(w2_ref, h1) + b2_ref[...], 0.0)     # (hidden, TB) f32

    head = mm(wh_ref, h2) + bh_ref[...]                     # (2A, TB): fused mu/log_std
    mu = head[:A]
    log_std = jnp.clip(head[A:], min_log_std, max_log_std)

    if need_eps:
        eps = eps_ref[...]
    if evaluate:
        pre = mu
    else:
        pre = mu + jnp.exp(log_std) * eps                   # dist.rsample()
    action = jnp.tanh(pre)

    if with_logprob:
        # Normal(mu, std).log_prob(z) with (z - mu) / std == eps, plus the tanh
        # Jacobian correction evaluated at `action` (exactly as the torch code).
        # TODO(synk): keep log(1 - tanh^2 + 1e-7) verbatim to match torch; the
        # stable 2*(log2 - x - softplus(-2x)) form changes values slightly.
        logp = -0.5 * (eps * eps) - log_std - 0.5 * _LOG_2PI
        logp = logp - jnp.log(1.0 - action * action + 1e-7)
        logp = jnp.sum(logp, axis=0, keepdims=True)         # (1, TB)

    if max_action is not None:
        action = max_action * action

    if with_logprob:
        out_ref[:A, :] = action.astype(out_ref.dtype)
        out_ref[A:, :] = logp.astype(out_ref.dtype)
    else:
        out_ref[...] = action.astype(out_ref.dtype)


@functools.partial(
    jax.jit,
    static_argnames=("max_action", "evaluate", "with_logprob", "min_log_std",
                     "max_log_std", "block_b", "matmul_dtype", "state_transposed"))
def actor_sac_forward(state, eps_t, w1, b1, w2, b2, w_mu, b_mu, w_ls, b_ls, *,
                      max_action=None, evaluate=False, with_logprob=True,
                      min_log_std=-20.0, max_log_std=2.0,
                      block_b=2048, matmul_dtype=jnp.float32,
                      state_transposed=False):
    """Pallas forward of ActorSAC_mlp.

    state: (B, n_states) f32, or (n_states, B) if state_transposed=True (skips
           the one remaining wrapper-side transpose pass).
    eps_t: (n_actions, B) N(0,1) noise, batch-last layout (free to generate this
           way with jax.random).  May be None when evaluate and not with_logprob.
    Weights in PyTorch (out, in) layout, biases (out,).
    Returns (action (B, n_actions), log_prob (B, 1) or None).
    """
    if state_transposed:
        n_states, B = state.shape
    else:
        B, n_states = state.shape
    hidden = w1.shape[0]
    A = w_mu.shape[0]
    need_eps = with_logprob or (not evaluate)

    # ---- batch tiling -------------------------------------------------------
    # Big tiles amortize the per-grid-step overhead; keep >=2 steps when the
    # batch allows so the "parallel" axis can shard across v7x's two TCs.  Only
    # shrink when (hidden, TB) f32 intermediates + weights crowd scoped VMEM.
    w_itemsize = jnp.dtype(matmul_dtype).itemsize
    w_bytes = 2 * w_itemsize * (hidden * n_states + hidden * hidden + 2 * A * hidden)
    per_col_bytes = 4 * (2 * hidden + 2 * (n_states + A) + 2 * (A + 1))
    max_tb = max(_LANE, ((_VMEM_BUDGET_BYTES - w_bytes) // max(per_col_bytes, 1))
                 // _LANE * _LANE)
    block_b = max(_LANE, min(block_b, max_tb))

    B_pad_min = _round_up(B, _LANE)
    n_tiles = max(1, _cdiv(B_pad_min, block_b))
    if n_tiles == 1 and B_pad_min >= 2 * _LANE:
        n_tiles = 2                       # let v7x megacore split the batch
    TB = _round_up(_cdiv(B_pad_min, n_tiles), _LANE)
    B_pad = n_tiles * TB

    # ---- operand prep (at most one small fused pad/transpose HLO) -----------
    if state_transposed:
        x_t = state.astype(jnp.float32)
        if B_pad != B:
            x_t = jnp.pad(x_t, ((0, 0), (0, B_pad - B)))
    else:
        x_t = state.astype(jnp.float32)
        if B_pad != B:
            x_t = jnp.pad(x_t, ((0, B_pad - B), (0, 0)))
        x_t = x_t.T   # pass state_transposed=True to avoid this pass entirely

    # Weights cast to the MXU input dtype ONCE here (they sit resident in VMEM;
    # casting in-kernel would redo it every grid step).  Biases stay f32 and are
    # added on the f32 accumulator.  mu/log_std heads fused into one (2A, hidden)
    # weight — they come from a single torch Linear anyway.
    w1c = w1.astype(matmul_dtype)
    w2c = w2.astype(matmul_dtype)
    whc = jnp.concatenate([w_mu, w_ls], axis=0).astype(matmul_dtype)
    b1c = b1.reshape(hidden, 1).astype(jnp.float32)
    b2c = b2.reshape(hidden, 1).astype(jnp.float32)
    bhc = jnp.concatenate([b_mu, b_ls], axis=0).reshape(2 * A, 1).astype(jnp.float32)

    inputs = [x_t]
    in_specs = [pl.BlockSpec((n_states, TB), lambda i: (0, i))]
    if need_eps:
        e_t = eps_t.astype(jnp.float32)
        if B_pad != B:
            e_t = jnp.pad(e_t, ((0, 0), (0, B_pad - B)))
        inputs.append(e_t)
        in_specs.append(pl.BlockSpec((A, TB), lambda i: (0, i)))

    # Resident params: constant index_map -> fetched once, stay in VMEM.
    # NOTE: for very large `hidden`, pl.Buffered(1) on these specs would also
    # drop the default double-buffer copy of the weights (omitted here; weights
    # are small and the bf16 path already halves them).
    def resident(shape):
        return pl.BlockSpec(shape, lambda i: (0, 0))

    inputs += [w1c, b1c, w2c, b2c, whc, bhc]
    in_specs += [resident((hidden, n_states)), resident((hidden, 1)),
                 resident((hidden, hidden)), resident((hidden, 1)),
                 resident((2 * A, hidden)), resident((2 * A, 1))]

    out_rows = A + 1 if with_logprob else A   # action rows (+ logp row), one buffer

    kernel = functools.partial(
        _actor_kernel, n_actions=A, evaluate=evaluate, with_logprob=with_logprob,
        max_action=max_action, min_log_std=min_log_std, max_log_std=max_log_std)

    out = pl.pallas_call(
        kernel,
        grid=(n_tiles,),
        in_specs=in_specs,
        out_specs=pl.BlockSpec((out_rows, TB), lambda i: (0, i)),
        out_shape=jax.ShapeDtypeStruct((out_rows, B_pad), jnp.float32),
        compiler_params=pltpu.CompilerParams(
            dimension_semantics=("parallel",),
            vmem_limit_bytes=_VMEM_LIMIT_BYTES),
    )(*inputs)

    action = out[:A, :B].T
    log_prob = out[A:, :B].T if with_logprob else None
    return action, log_prob


def init_params(key, n_states, n_actions, hidden_units):
    """Deterministic synthetic init (stand-in for build_mlp + initialize_weight)."""
    ks = jax.random.split(key, 6)

    def lin(kw, kb, fan_in, fan_out):
        bound = 1.0 / math.sqrt(fan_in)
        w = jax.random.uniform(kw, (fan_out, fan_in), jnp.float32, -bound, bound)
        b = jax.random.uniform(kb, (fan_out,), jnp.float32, -bound, bound)
        return w, b

    w1, b1 = lin(ks[0], ks[1], n_states, hidden_units)
    w2, b2 = lin(ks[2], ks[3], hidden_units, hidden_units)
    w3, b3 = lin(ks[4], ks[5], hidden_units, 2 * n_actions)
    # torch.chunk(net(state), 2, dim=-1): first half of the output dim is mu.
    w_mu, w_ls = w3[:n_actions], w3[n_actions:]
    b_mu, b_ls = b3[:n_actions], b3[n_actions:]
    return w1, b1, w2, b2, w_mu, b_mu, w_ls, b_ls


if __name__ == "__main__":
    key = jax.random.PRNGKey(0)
    k_state, k_eps, k_params = jax.random.split(key, 3)

    batch = 200            # exercises lane padding + a 2-step "parallel" grid
    n_states = 16
    n_actions = 4
    hidden_units = 32
    max_action = 2.0

    state = jax.random.normal(k_state, (batch, n_states), jnp.float32)
    # Noise generated directly in (n_actions, batch) layout -> no transpose pass.
    eps_t = jax.random.normal(k_eps, (n_actions, batch), jnp.float32)
    params = init_params(k_params, n_states, n_actions, hidden_units)

    action, log_prob = actor_sac_forward(state, eps_t, *params,
                                         max_action=max_action,
                                         evaluate=False, with_logprob=True)
    jax.block_until_ready((action, log_prob))

    # Pure-JAX reference of the PyTorch forward with the same noise.
    w1, b1, w2, b2, w_mu, b_mu, w_ls, b_ls = params
    eps = eps_t.T
    h1 = jnp.maximum(state @ w1.T + b1, 0.0)
    h2 = jnp.maximum(h1 @ w2.T + b2, 0.0)
    mu = h2 @ w_mu.T + b_mu
    log_std = jnp.clip(h2 @ w_ls.T + b_ls, -20.0, 2.0)
    std = jnp.exp(log_std)
    z = mu + std * eps
    a_pre = jnp.tanh(z)
    logp_ref = (-0.5 * eps ** 2 - log_std - 0.5 * _LOG_2PI
                - jnp.log(1.0 - a_pre ** 2 + 1e-7)).sum(-1, keepdims=True)

    assert action.shape == (batch, n_actions)
    assert log_prob.shape == (batch, 1)
    assert jnp.allclose(action, max_action * a_pre, atol=1e-4, rtol=1e-4)
    assert jnp.allclose(log_prob, logp_ref, atol=1e-3, rtol=1e-3)

    # evaluate=True: action = tanh(mu); log_prob still uses the sampled z (as in torch).
    a_ev, lp_ev = actor_sac_forward(state, eps_t, *params, max_action=max_action,
                                    evaluate=True, with_logprob=True)
    jax.block_until_ready((a_ev, lp_ev))
    a_ev_ref = max_action * jnp.tanh(mu)
    lp_ev_ref = (-0.5 * eps ** 2 - log_std - 0.5 * _LOG_2PI
                 - jnp.log(1.0 - jnp.tanh(mu) ** 2 + 1e-7)).sum(-1, keepdims=True)
    assert jnp.allclose(a_ev, a_ev_ref, atol=1e-4, rtol=1e-4)
    assert jnp.allclose(lp_ev, lp_ev_ref, atol=1e-3, rtol=1e-3)

    # Inference path: evaluate + with_logprob=False skips eps/exp/tanh-Jacobian/logp.
    a_inf, lp_inf = actor_sac_forward(state, None, *params, max_action=max_action,
                                      evaluate=True, with_logprob=False)
    jax.block_until_ready(a_inf)
    assert lp_inf is None
    assert jnp.allclose(a_inf, a_ev_ref, atol=1e-4, rtol=1e-4)

    # Feature-major state path (no wrapper-side transpose at all).
    a_t, lp_t = actor_sac_forward(state.T, eps_t, *params, max_action=max_action,
                                  state_transposed=True)
    jax.block_until_ready((a_t, lp_t))
    assert jnp.allclose(a_t, action, atol=1e-5, rtol=1e-5)

    # bf16-MXU-input path (weights cast once in wrapper; f32 accumulation).
    a_bf, lp_bf = actor_sac_forward(state, eps_t, *params, max_action=max_action,
                                    matmul_dtype=jnp.bfloat16)
    jax.block_until_ready((a_bf, lp_bf))
    assert bool(jnp.all(jnp.isfinite(a_bf)))
    assert bool(jnp.all(jnp.isfinite(lp_bf)))

    print("KERNEL_OK")
</pallas_src>

<mosaic_0001>
module attributes {stable_mosaic.version = 11 : i64} {
  func.func @_actor_kernel(%arg0: i32, %arg1: memref<16x128xf32, #tpu.memory_space<vmem>>, %arg2: memref<4x128xf32, #tpu.memory_space<vmem>>, %arg3: memref<32x16xf32, #tpu.memory_space<vmem>>, %arg4: memref<32x1xf32, #tpu.memory_space<vmem>>, %arg5: memref<32x32xf32, #tpu.memory_space<vmem>>, %arg6: memref<32x1xf32, #tpu.memory_space<vmem>>, %arg7: memref<8x32xf32, #tpu.memory_space<vmem>>, %arg8: memref<8x1xf32, #tpu.memory_space<vmem>>, %arg9: memref<5x128xf32, #tpu.memory_space<vmem>>) attributes {dimension_semantics = [#tpu.dimension_semantics<parallel>], iteration_bounds = array<i64: 2>, scalar_prefetch = 0 : i64, scratch_operands = 0 : i64, tpu.core_type = #tpu.core_type<tc>, window_params = [{transform_indices = @transform_0, window_bounds = array<i64: 16, 128>}, {transform_indices = @transform_1, window_bounds = array<i64: 4, 128>}, {pipeline_mode = #tpu.pipeline_mode<synchronous>, transform_indices = @transform_2, window_bounds = array<i64: 32, 16>}, {pipeline_mode = #tpu.pipeline_mode<synchronous>, transform_indices = @transform_3, window_bounds = array<i64: 32, 1>}, {pipeline_mode = #tpu.pipeline_mode<synchronous>, transform_indices = @transform_4, window_bounds = array<i64: 32, 32>}, {pipeline_mode = #tpu.pipeline_mode<synchronous>, transform_indices = @transform_5, window_bounds = array<i64: 32, 1>}, {pipeline_mode = #tpu.pipeline_mode<synchronous>, transform_indices = @transform_6, window_bounds = array<i64: 8, 32>}, {pipeline_mode = #tpu.pipeline_mode<synchronous>, transform_indices = @transform_7, window_bounds = array<i64: 8, 1>}, {transform_indices = @transform_8, window_bounds = array<i64: 5, 128>}]} {
    %c0 = arith.constant 0 : index
    %c0_0 = arith.constant 0 : index
    %0 = vector.load %arg1[%c0, %c0_0] : memref<16x128xf32, #tpu.memory_space<vmem>>, vector<16x128xf32>
    %c0_1 = arith.constant 0 : index
    %c0_2 = arith.constant 0 : index
    %1 = vector.load %arg3[%c0_1, %c0_2] : memref<32x16xf32, #tpu.memory_space<vmem>>, vector<32x16xf32>
    %cst = arith.constant dense<0.000000e+00> : vector<32x128xf32>
    %2 = tpu.matmul %1, %0, %cst {dimension_numbers = #tpu.dot_dimension_numbers<[1], [0], [0], [1], [0, 0, 1, 1], [], []>} : vector<32x16xf32>, vector<16x128xf32>, vector<32x128xf32> -> vector<32x128xf32>
    %c0_3 = arith.constant 0 : index
    %c0_4 = arith.constant 0 : index
    %3 = vector.load %arg4[%c0_3, %c0_4] : memref<32x1xf32, #tpu.memory_space<vmem>>, vector<32x1xf32>
    %4 = vector.broadcast %3 : vector<32x1xf32> to vector<32x128xf32>
    %5 = arith.addf %2, %4 : vector<32x128xf32>
    %cst_5 = arith.constant 0.000000e+00 : f32
    %6 = vector.broadcast %cst_5 : f32 to vector<32x128xf32>
    %7 = arith.maximumf %5, %6 : vector<32x128xf32>
    %c0_6 = arith.constant 0 : index
    %c0_7 = arith.constant 0 : index
    %8 = vector.load %arg5[%c0_6, %c0_7] : memref<32x32xf32, #tpu.memory_space<vmem>>, vector<32x32xf32>
    %cst_8 = arith.constant dense<0.000000e+00> : vector<32x128xf32>
    %9 = tpu.matmul %8, %7, %cst_8 {dimension_numbers = #tpu.dot_dimension_numbers<[1], [0], [0], [1], [0, 0, 1, 1], [], []>} : vector<32x32xf32>, vector<32x128xf32>, vector<32x128xf32> -> vector<32x128xf32>
    %c0_9 = arith.constant 0 : index
    %c0_10 = arith.constant 0 : index
    %10 = vector.load %arg6[%c0_9, %c0_10] : memref<32x1xf32, #tpu.memory_space<vmem>>, vector<32x1xf32>
    %11 = vector.broadcast %10 : vector<32x1xf32> to vector<32x128xf32>
    %12 = arith.addf %9, %11 : vector<32x128xf32>
    %cst_11 = arith.constant 0.000000e+00 : f32
    %13 = vector.broadcast %cst_11 : f32 to vector<32x128xf32>
    %14 = arith.maximumf %12, %13 : vector<32x128xf32>
    %c0_12 = arith.constant 0 : index
    %c0_13 = arith.constant 0 : index
    %15 = vector.load %arg7[%c0_12, %c0_13] : memref<8x32xf32, #tpu.memory_space<vmem>>, vector<8x32xf32>
    %cst_14 = arith.constant dense<0.000000e+00> : vector<8x128xf32>
    %16 = tpu.matmul %15, %14, %cst_14 {dimension_numbers = #tpu.dot_dimension_numbers<[1], [0], [0], [1], [0, 0, 1, 1], [], []>} : vector<8x32xf32>, vector<32x128xf32>, vector<8x128xf32> -> vector<8x128xf32>
    %c0_15 = arith.constant 0 : index
    %c0_16 = arith.constant 0 : index
    %17 = vector.load %arg8[%c0_15, %c0_16] : memref<8x1xf32, #tpu.memory_space<vmem>>, vector<8x1xf32>
    %18 = vector.broadcast %17 : vector<8x1xf32> to vector<8x128xf32>
    %19 = arith.addf %16, %18 : vector<8x128xf32>
    %20 = vector.extract_strided_slice %19 {offsets = [0, 0], sizes = [4, 128], strides = [1, 1]} : vector<8x128xf32> to vector<4x128xf32>
    %21 = vector.extract_strided_slice %19 {offsets = [4, 0], sizes = [4, 128], strides = [1, 1]} : vector<8x128xf32> to vector<4x128xf32>
    %cst_17 = arith.constant -2.000000e+01 : f32
    %cst_18 = arith.constant 2.000000e+00 : f32
    %22 = vector.broadcast %cst_17 : f32 to vector<4x128xf32>
    %23 = arith.maximumf %22, %21 : vector<4x128xf32>
    %24 = vector.broadcast %cst_18 : f32 to vector<4x128xf32>
    %25 = arith.minimumf %24, %23 : vector<4x128xf32>
    %c0_19 = arith.constant 0 : index
    %c0_20 = arith.constant 0 : index
    %26 = vector.load %arg2[%c0_19, %c0_20] : memref<4x128xf32, #tpu.memory_space<vmem>>, vector<4x128xf32>
    %27 = math.exp %25 : vector<4x128xf32>
    %28 = arith.mulf %27, %26 : vector<4x128xf32>
    %29 = arith.addf %20, %28 : vector<4x128xf32>
    %30 = math.tanh %29 : vector<4x128xf32>
    %31 = arith.mulf %26, %26 : vector<4x128xf32>
    %cst_21 = arith.constant -5.000000e-01 : f32
    %32 = vector.broadcast %cst_21 : f32 to vector<4x128xf32>
    %33 = arith.mulf %32, %31 : vector<4x128xf32>
    %34 = arith.subf %33, %25 : vector<4x128xf32>
    %cst_22 = arith.constant 0.918938517 : f32
    %35 = vector.broadcast %cst_22 : f32 to vector<4x128xf32>
    %36 = arith.subf %34, %35 : vector<4x128xf32>
    %37 = arith.mulf %30, %30 : vector<4x128xf32>
    %cst_23 = arith.constant 1.000000e+00 : f32
    %38 = vector.broadcast %cst_23 : f32 to vector<4x128xf32>
    %39 = arith.subf %38, %37 : vector<4x128xf32>
    %cst_24 = arith.constant 1.000000e-07 : f32
    %40 = vector.broadcast %cst_24 : f32 to vector<4x128xf32>
    %41 = arith.addf %39, %40 : vector<4x128xf32>
    %42 = math.log %41 : vector<4x128xf32>
    %43 = arith.subf %36, %42 : vector<4x128xf32>
    %cst_25 = arith.constant dense<0.000000e+00> : vector<128xf32>
    %44 = vector.multi_reduction <add>, %43, %cst_25 [0] : vector<4x128xf32> to vector<128xf32>
    %45 = vector.shape_cast %44 : vector<128xf32> to vector<1x128xf32>
    %cst_26 = arith.constant 2.000000e+00 : f32
    %46 = vector.broadcast %cst_26 : f32 to vector<4x128xf32>
    %47 = arith.mulf %46, %30 : vector<4x128xf32>
    %c0_27 = arith.constant 0 : index
    %c0_28 = arith.constant 0 : index
    %48 = vector.load %arg9[%c0_27, %c0_28] : memref<5x128xf32, #tpu.memory_space<vmem>>, vector<4x128xf32>
    tpu.vector_store %arg9[%c0_27, %c0_28], %47 {strides = array<i32>} : memref<5x128xf32, #tpu.memory_space<vmem>>, vector<4x128xf32>,
    %c4 = arith.constant 4 : index
    %c0_29 = arith.constant 0 : index
    %49 = vector.load %arg9[%c4, %c0_29] : memref<5x128xf32, #tpu.memory_space<vmem>>, vector<1x128xf32>
    tpu.vector_store %arg9[%c4, %c0_29], %45 {strides = array<i32>} : memref<5x128xf32, #tpu.memory_space<vmem>>, vector<1x128xf32>,
    return
  }
  func.func @transform_0(%arg0: i32) -> (i32, i32) {
    %c0_i32 = arith.constant 0 : i32
    %c0_i32_0 = arith.constant 0 : i32
    return %c0_i32, %arg0 : i32, i32
  }
  func.func @transform_1(%arg0: i32) -> (i32, i32) {
    %c0_i32 = arith.constant 0 : i32
    %c0_i32_0 = arith.constant 0 : i32
    return %c0_i32, %arg0 : i32, i32
  }
  func.func @transform_2(%arg0: i32) -> (i32, i32) {
    %c0_i32 = arith.constant 0 : i32
    %c0_i32_0 = arith.constant 0 : i32
    %c0_i32_1 = arith.constant 0 : i32
    return %c0_i32, %c0_i32_0 : i32, i32
  }
  func.func @transform_3(%arg0: i32) -> (i32, i32) {
    %c0_i32 = arith.constant 0 : i32
    %c0_i32_0 = arith.constant 0 : i32
    %c0_i32_1 = arith.constant 0 : i32
    return %c0_i32, %c0_i32_0 : i32, i32
  }
  func.func @transform_4(%arg0: i32) -> (i32, i32) {
    %c0_i32 = arith.constant 0 : i32
    %c0_i32_0 = arith.constant 0 : i32
    %c0_i32_1 = arith.constant 0 : i32
    return %c0_i32, %c0_i32_0 : i32, i32
  }
  func.func @transform_5(%arg0: i32) -> (i32, i32) {
    %c0_i32 = arith.constant 0 : i32
    %c0_i32_0 = arith.constant 0 : i32
    %c0_i32_1 = arith.constant 0 : i32
    return %c0_i32, %c0_i32_0 : i32, i32
  }
  func.func @transform_6(%arg0: i32) -> (i32, i32) {
    %c0_i32 = arith.constant 0 : i32
    %c0_i32_0 = arith.constant 0 : i32
    %c0_i32_1 = arith.constant 0 : i32
    return %c0_i32, %c0_i32_0 : i32, i32
  }
  func.func @transform_7(%arg0: i32) -> (i32, i32) {
    %c0_i32 = arith.constant 0 : i32
    %c0_i32_0 = arith.constant 0 : i32
    %c0_i32_1 = arith.constant 0 : i32
    return %c0_i32, %c0_i32_0 : i32, i32
  }
  func.func @transform_8(%arg0: i32) -> (i32, i32) {
    %c0_i32 = arith.constant 0 : i32
    %c0_i32_0 = arith.constant 0 : i32
    return %c0_i32, %arg0 : i32, i32
  }
}

</mosaic_0001>

<llo_original>
// kernel: actor_sac_forward.1
$region0: #{actor_sac_forward.1}
  #allocation0 [shape = 'u32[]', space=smem, size = 0x4, offset = 0x4, fixed_abs, tag = 'smem constant byte address 0x4 - core index']
  #allocation1 [shape = 'u32[144,128]{1,0:T(1,128)}', space=vmem, size = 0x12000, scoped, tag = 'internal scratch']
  %s0 = inlined_call_operand.vmem [shape: f32[16,256], index: 0, kind: input, shape index: {}]
  %s1 = inlined_call_operand.vmem [shape: f32[4,256], index: 1, kind: input, shape index: {}]
  %s2 = inlined_call_operand.vmem [shape: f32[32,16], index: 2, kind: input, shape index: {}]
  %s3 = inlined_call_operand.vmem [shape: f32[32,1], index: 3, kind: input, shape index: {}]
  %s4 = inlined_call_operand.vmem [shape: f32[32,32], index: 4, kind: input, shape index: {}]
  %s5 = inlined_call_operand.vmem [shape: f32[32,1], index: 5, kind: input, shape index: {}]
  %s6 = inlined_call_operand.vmem [shape: f32[8,32], index: 6, kind: input, shape index: {}]
  %s7 = inlined_call_operand.vmem [shape: f32[8,1], index: 7, kind: input, shape index: {}]
  %s8 = inlined_call_operand.vmem [shape: f32[5,256], index: 8, kind: output, shape index: {}]
  %s9 = sld [smem:[#allocation0]]
  $region103: #{actor_sac_forward.1} parent=0
    _
  %s11 = ssub.s32 1, %s9
  %s12 = scalar_select 0, %s11, %s9
  $region1: #{actor_sac_forward.1} parent=0
    #allocation2 [shape = 'u8[16384]{0}', space=vmem, size = 0x4000, scoped, tag = 'input window, operand 0']
    loop: start=0, step=1, limit=4
    $region2: #{actor_sac_forward.1} parent=1 // loop_pre_header
      _
    $region3: #{actor_sac_forward.1} parent=1 // loop_header
      %s14 = sphi 0, %s18
      %p15 = scmp.ge.s32.totalorder %s14, 4
      %s24 = sphi 0, %s26
      %s27 = sphi 0, %s24
      %s28 = sphi 0, %s27
      %s44 = sphi 0, %s28
      %s50 = sphi 0, %s52
      %s53 = sphi 0, %s50
      %s54 = sphi 0, %s53
      %s70 = sphi 0, %s54
      %s74 = sphi 0, %s74
      %s76 = sphi 0, %s74
      %s77 = sphi 0, %s76
      %s91 = sphi 0, %s77
      %s95 = sphi 0, %s95
      %s97 = sphi 0, %s95
      %s98 = sphi 0, %s97
      %s112 = sphi 0, %s98
      %s116 = sphi 0, %s116
      %s118 = sphi 0, %s116
      %s119 = sphi 0, %s118
      %s133 = sphi 0, %s119
      %s137 = sphi 0, %s137
      %s139 = sphi 0, %s137
      %s140 = sphi 0, %s139
      %s154 = sphi 0, %s140
      %s158 = sphi 0, %s158
      %s160 = sphi 0, %s158
      %s161 = sphi 0, %s160
      %s175 = sphi 0, %s161
      %s179 = sphi 0, %s179
      %s181 = sphi 0, %s179
      %s182 = sphi 0, %s181
      %s196 = sphi 0, %s182
      %s202 = sphi 0, %s204
      %s205 = sphi 0, %s202
      %s206 = sphi 0, %s205
      %s222 = sphi 0, %s206
    $region4: #{actor_sac_forward.1} parent=1 // loop_header_branch
      %17 = sbr.rel (%p15) target = $region8
    $region5: #{actor_sac_forward.1} parent=1 // loop_body
      %s19 = ssub.s32 %s14, 1
      %s20 = ssub.s32 %s14, 2
      %s21 = sadd.s32 %s14, 1
      %s22 = ssub.s32 %s14, %s21
      %p23 = scmp.eq.s32.totalorder %s22, 0
      %s25 = sadd.s32 %s24, 1
      %s26 = scalar_select %p23, %s24, %s25
      %p29 = pneg %p23
      %p30 = scmp.eq.s32.totalorder %s14, 1
      %p31 = por %p29, %p30
      %p32 = scmp.ne.s32.totalorder %s24, %s27
      %p33 = scmp.eq.s32.totalorder %s14, 0
      %p34 = por %p32, %p33
      %p35 = scmp.ne.s32.totalorder %s24, %s27
      %p36 = scmp.eq.s32.totalorder %s19, 1
      %p37 = por %p35, %p36
      %p38 = scmp.ne.s32.totalorder %s27, %s28
      %p39 = scmp.eq.s32.totalorder %s19, 0
      %p40 = por %p38, %p39
      %p41 = scmp.ne.s32.totalorder %s27, %s28
      %p42 = scmp.eq.s32.totalorder %s20, 1
      %p43 = por %p41, %p42
      %p45 = scmp.ne.s32.totalorder %s28, %s44
      %p46 = scmp.eq.s32.totalorder %s20, 0
      %p47 = por %p45, %p46
      %s48 = ssub.s32 %s14, %s21
      %p49 = scmp.eq.s32.totalorder %s48, 0
      %s51 = sadd.s32 %s50, 1
      %s52 = scalar_select %p49, %s50, %s51
      %p55 = pneg %p49
      %p56 = scmp.eq.s32.totalorder %s14, 1
      %p57 = por %p55, %p56
      %p58 = scmp.ne.s32.totalorder %s50, %s53
      %p59 = scmp.eq.s32.totalorder %s14, 0
      %p60 = por %p58, %p59
      %p61 = scmp.ne.s32.totalorder %s50, %s53
      %p62 = scmp.eq.s32.totalorder %s19, 1
      %p63 = por %p61, %p62
      %p64 = scmp.ne.s32.totalorder %s53, %s54
      %p65 = scmp.eq.s32.totalorder %s19, 0
      %p66 = por %p64, %p65
      %p67 = scmp.ne.s32.totalorder %s53, %s54
      %p68 = scmp.eq.s32.totalorder %s20, 1
      %p69 = por %p67, %p68
      %p71 = scmp.ne.s32.totalorder %s54, %s70
      %p72 = scmp.eq.s32.totalorder %s20, 0
      %p73 = por %p71, %p72
      %s75 = sadd.s32 %s74, 1
      %p78 = scmp.eq.s32.totalorder %s14, 1
      %p79 = scmp.ne.s32.totalorder %s74, %s76
      %p80 = scmp.eq.s32.totalorder %s14, 0
      %p81 = por %p79, %p80
      %p82 = scmp.ne.s32.totalorder %s74, %s76
      %p83 = scmp.eq.s32.totalorder %s19, 1
      %p84 = por %p82, %p83
      %p85 = scmp.ne.s32.totalorder %s76, %s77
      %p86 = scmp.eq.s32.totalorder %s19, 0
      %p87 = por %p85, %p86
      %p88 = scmp.ne.s32.totalorder %s76, %s77
      %p89 = scmp.eq.s32.totalorder %s20, 1
      %p90 = por %p88, %p89
      %p92 = scmp.ne.s32.totalorder %s77, %s91
      %p93 = scmp.eq.s32.totalorder %s20, 0
      %p94 = por %p92, %p93
      %s96 = sadd.s32 %s95, 1
      %p99 = scmp.eq.s32.totalorder %s14, 1
      %p100 = scmp.ne.s32.totalorder %s95, %s97
      %p101 = scmp.eq.s32.totalorder %s14, 0
      %p102 = por %p100, %p101
      %p103 = scmp.ne.s32.totalorder %s95, %s97
      %p104 = scmp.eq.s32.totalorder %s19, 1
      %p105 = por %p103, %p104
      %p106 = scmp.ne.s32.totalorder %s97, %s98
      %p107 = scmp.eq.s32.totalorder %s19, 0
      %p108 = por %p106, %p107
      %p109 = scmp.ne.s32.totalorder %s97, %s98
      %p110 = scmp.eq.s32.totalorder %s20, 1
      %p111 = por %p109, %p110
      %p113 = scmp.ne.s32.totalorder %s98, %s112
      %p114 = scmp.eq.s32.totalorder %s20, 0
      %p115 = por %p113, %p114
      %s117 = sadd.s32 %s116, 1
      %p120 = scmp.eq.s32.totalorder %s14, 1
      %p121 = scmp.ne.s32.totalorder %s116, %s118
      %p122 = scmp.eq.s32.totalorder %s14, 0
      %p123 = por %p121, %p122
      %p124 = scmp.ne.s32.totalorder %s116, %s118
      %p125 = scmp.eq.s32.totalorder %s19, 1
      %p126 = por %p124, %p125
      %p127 = scmp.ne.s32.totalorder %s118, %s119
      %p128 = scmp.eq.s32.totalorder %s19, 0
      %p129 = por %p127, %p128
      %p130 = scmp.ne.s32.totalorder %s118, %s119
      %p131 = scmp.eq.s32.totalorder %s20, 1
      %p132 = por %p130, %p131
      %p134 = scmp.ne.s32.totalorder %s119, %s133
      %p135 = scmp.eq.s32.totalorder %s20, 0
      %p136 = por %p134, %p135
      %s138 = sadd.s32 %s137, 1
      %p141 = scmp.eq.s32.totalorder %s14, 1
      %p142 = scmp.ne.s32.totalorder %s137, %s139
      %p143 = scmp.eq.s32.totalorder %s14, 0
      %p144 = por %p142, %p143
      %p145 = scmp.ne.s32.totalorder %s137, %s139
      %p146 = scmp.eq.s32.totalorder %s19, 1
      %p147 = por %p145, %p146
      %p148 = scmp.ne.s32.totalorder %s139, %s140
      %p149 = scmp.eq.s32.totalorder %s19, 0
      %p150 = por %p148, %p149
      %p151 = scmp.ne.s32.totalorder %s139, %s140
      %p152 = scmp.eq.s32.totalorder %s20, 1
      %p153 = por %p151, %p152
      %p155 = scmp.ne.s32.totalorder %s140, %s154
      %p156 = scmp.eq.s32.totalorder %s20, 0
      %p157 = por %p155, %p156
      %s159 = sadd.s32 %s158, 1
      %p162 = scmp.eq.s32.totalorder %s14, 1
      %p163 = scmp.ne.s32.totalorder %s158, %s160
      %p164 = scmp.eq.s32.totalorder %s14, 0
      %p165 = por %p163, %p164
      %p166 = scmp.ne.s32.totalorder %s158, %s160
      %p167 = scmp.eq.s32.totalorder %s19, 1
      %p168 = por %p166, %p167
      %p169 = scmp.ne.s32.totalorder %s160, %s161
      %p170 = scmp.eq.s32.totalorder %s19, 0
      %p171 = por %p169, %p170
      %p172 = scmp.ne.s32.totalorder %s160, %s161
      %p173 = scmp.eq.s32.totalorder %s20, 1
      %p174 = por %p172, %p173
      %p176 = scmp.ne.s32.totalorder %s161, %s175
      %p177 = scmp.eq.s32.totalorder %s20, 0
      %p178 = por %p176, %p177
      %s180 = sadd.s32 %s179, 1
      %p183 = scmp.eq.s32.totalorder %s14, 1
      %p184 = scmp.ne.s32.totalorder %s179, %s181
      %p185 = scmp.eq.s32.totalorder %s14, 0
      %p186 = por %p184, %p185
      %p187 = scmp.ne.s32.totalorder %s179, %s181
      %p188 = scmp.eq.s32.totalorder %s19, 1
      %p189 = por %p187, %p188
      %p190 = scmp.ne.s32.totalorder %s181, %s182
      %p191 = scmp.eq.s32.totalorder %s19, 0
      %p192 = por %p190, %p191
      %p193 = scmp.ne.s32.totalorder %s181, %s182
      %p194 = scmp.eq.s32.totalorder %s20, 1
      %p195 = por %p193, %p194
      %p197 = scmp.ne.s32.totalorder %s182, %s196
      %p198 = scmp.eq.s32.totalorder %s20, 0
      %p199 = por %p197, %p198
      %s200 = ssub.s32 %s14, %s21
      %p201 = scmp.eq.s32.totalorder %s200, 0
      %s203 = sadd.s32 %s202, 1
      %s204 = scalar_select %p201, %s202, %s203
      %p207 = pneg %p201
      %p208 = scmp.eq.s32.totalorder %s14, 1
      %p209 = por %p207, %p208
      %p210 = scmp.ne.s32.totalorder %s202, %s205
      %p211 = scmp.eq.s32.totalorder %s14, 0
      %p212 = por %p210, %p211
      %p213 = scmp.ne.s32.totalorder %s202, %s205
      %p214 = scmp.eq.s32.totalorder %s19, 1
      %p215 = por %p213, %p214
      %p216 = scmp.ne.s32.totalorder %s205, %s206
      %p217 = scmp.eq.s32.totalorder %s19, 0
      %p218 = por %p216, %p217
      %p219 = scmp.ne.s32.totalorder %s205, %s206
      %p220 = scmp.eq.s32.totalorder %s20, 1
      %p221 = por %p219, %p220
      %p223 = scmp.ne.s32.totalorder %s206, %s222
      %p224 = scmp.eq.s32.totalorder %s20, 0
      %p225 = por %p223, %p224
      %p226 = scmp.le.s32.totalorder 1, %s14
      %p227 = scmp.lt.s32.totalorder %s14, 3
      %p228 = pnand %p226, %p227
      %p229 = pneg %p228
      // Predicated region
      $region9: #{actor_sac_forward.1} parent=5 // pred_check
        _
      $region10: #{actor_sac_forward.1} parent=5 // pred_check_branch
        %231 = sbr.rel (%p228) target = $region12
      $region11: #{actor_sac_forward.1} parent=5 // pred_region
        %s232 = ssub.s32 %s14, 1
        // Predicated region
        $region13: #{actor_sac_forward.1} parent=11 // pred_check
          %p233 = pneg %p87
        $region14: #{actor_sac_forward.1} parent=11 // pred_check_branch
          %235 = sbr.rel (%p233) target = $region16
        $region15: #{actor_sac_forward.1} parent=11 // pred_region
          _
        $region16: #{actor_sac_forward.1} parent=11 // pred_fallthru
          _
        // Predicated region
        $region17: #{actor_sac_forward.1} parent=11 // pred_check
          %p236 = pneg %p108
        $region18: #{actor_sac_forward.1} parent=11 // pred_check_branch
          %238 = sbr.rel (%p236) target = $region20
        $region19: #{actor_sac_forward.1} parent=11 // pred_region
          _
        $region20: #{actor_sac_forward.1} parent=11 // pred_fallthru
          _
        // Predicated region
        $region21: #{actor_sac_forward.1} parent=11 // pred_check
          %p239 = pneg %p129
        $region22: #{actor_sac_forward.1} parent=11 // pred_check_branch
          %241 = sbr.rel (%p239) target = $region24
        $region23: #{actor_sac_forward.1} parent=11 // pred_region
          _
        $region24: #{actor_sac_forward.1} parent=11 // pred_fallthru
          _
        // Predicated region
        $region25: #{actor_sac_forward.1} parent=11 // pred_check
          %p242 = pneg %p150
        $region26: #{actor_sac_forward.1} parent=11 // pred_check_branch
          %244 = sbr.rel (%p242) target = $region28
        $region27: #{actor_sac_forward.1} parent=11 // pred_region
          _
        $region28: #{actor_sac_forward.1} parent=11 // pred_fallthru
          _
        // Predicated region
        $region29: #{actor_sac_forward.1} parent=11 // pred_check
          %p245 = pneg %p171
        $region30: #{actor_sac_forward.1} parent=11 // pred_check_branch
          %247 = sbr.rel (%p245) target = $region32
        $region31: #{actor_sac_forward.1} parent=11 // pred_region
          _
        $region32: #{actor_sac_forward.1} parent=11 // pred_fallthru
          _
        // Predicated region
        $region33: #{actor_sac_forward.1} parent=11 // pred_check
          %p248 = pneg %p192
        $region34: #{actor_sac_forward.1} parent=11 // pred_check_branch
          %250 = sbr.rel (%p248) target = $region36
        $region35: #{actor_sac_forward.1} parent=11 // pred_region
          _
        $region36: #{actor_sac_forward.1} parent=11 // pred_fallthru
          _
      $region12: #{actor_sac_forward.1} parent=5 // pred_fallthru
        _
      %p251 = scmp.lt.s32.totalorder %s14, 2
      // Predicated region
      $region37: #{actor_sac_forward.1} parent=5 // pred_check
        %p252 = pneg %p251
      $region38: #{actor_sac_forward.1} parent=5 // pred_check_branch
        %254 = sbr.rel (%p252) target = $region40
      $region39: #{actor_sac_forward.1} parent=5 // pred_region
        // Predicated region
        $region41: #{actor_sac_forward.1} parent=39 // pred_check
          %p255 = pneg %p34
        $region42: #{actor_sac_forward.1} parent=39 // pred_check_branch
          %257 = sbr.rel (%p255) target = $region44
        $region43: #{actor_sac_forward.1} parent=39 // pred_region
          %s258 = sand.u32 %s24, 1
          %s259 = sand.u32 %s24, 1
          %s260 = smul.addr %s259, 16
          %s261 = scalar_lea.vmem [#allocation2], %s260
          %s262 = smul.addr %s14, 8
          %s263 = scalar_lea.vmem %s0, %s262
          // Predicated region
          $region45: #{actor_sac_forward.1} parent=43 // pred_check
            _
          $region46: #{actor_sac_forward.1} parent=43 // pred_check_branch
            %265 = sbr.rel (0) target = $region48
          $region47: #{actor_sac_forward.1} parent=43 // pred_region
            // Predicated region
            $region49: #{actor_sac_forward.1} parent=47 // pred_check
              _
            $region50: #{actor_sac_forward.1} parent=47 // pred_check_branch
              %267 = sbr.rel (0) target = $region52
            $region51: #{actor_sac_forward.1} parent=47 // pred_region
              // Predicated region
              $region64: #{actor_sac_forward.1} parent=51 // pred_check
                _
              $region65: #{actor_sac_forward.1} parent=51 // pred_check_branch
                %284 = sbr.rel (0) target = $region67
              $region66: #{actor_sac_forward.1} parent=51 // pred_region
                loop: start=0, step=1, limit=1
                $region68: #{actor_sac_forward.1} parent=66 // loop_pre_header
                  _
                $region69: #{actor_sac_forward.1} parent=66 // loop_header
                  %s286 = sphi 0, %s290
                  %p287 = scmp.ge.s32.totalorder %s286, 1
                  %s291 = sphi %s263, %s263
                  %s292 = sphi %s261, %s261
                $region70: #{actor_sac_forward.1} parent=66 // loop_header_branch
                  %289 = sbr.rel (%p287) target = $region74
                $region71: #{actor_sac_forward.1} parent=66 // loop_body
                  %v293 = vld [vmem:[%s291] sm:$0xff]
                  %294 = vst [vmem:[%s292] sm:$0xff] %v293
                  %v295 = vld [vmem:[%s291 + $0x10] sm:$0xff]
                  %296 = vst [vmem:[%s292 + $0x8] sm:$0xff] %v295
                $region72: #{actor_sac_forward.1} parent=66 // loop_footer
                  %s290 = sadd.s32 1, %s286
                $region73: #{actor_sac_forward.1} parent=66 // loop_footer_branch
                  %285 = sbr.rel target = $region69
                $region74: #{actor_sac_forward.1} parent=66 // loop_exit
                  _
              $region67: #{actor_sac_forward.1} parent=51 // pred_fallthru
                _
              // Predicated region
              $region75: #{actor_sac_forward.1} parent=51 // pred_check
                _
              $region76: #{actor_sac_forward.1} parent=51 // pred_check_branch
                %298 = sbr.rel target = $region78
              $region77: #{actor_sac_forward.1} parent=51 // pred_region
                _
              $region78: #{actor_sac_forward.1} parent=51 // pred_fallthru
                _
            $region52: #{actor_sac_forward.1} parent=47 // pred_fallthru
              _
            // Predicated region
            $region53: #{actor_sac_forward.1} parent=47 // pred_check
              _
            $region54: #{actor_sac_forward.1} parent=47 // pred_check_branch
              %269 = sbr.rel target = $region56
            $region55: #{actor_sac_forward.1} parent=47 // pred_region
              loop: start=0, step=1, limit=1
              $region57: #{actor_sac_forward.1} parent=55 // loop_pre_header
                _
              $region58: #{actor_sac_forward.1} parent=55 // loop_header
                %s272 = sphi 0, %s276
                %p273 = scmp.ge.s32.totalorder %s272, 1
                %s277 = sphi %s263, %s263
                %s278 = sphi %s261, %s261
              $region59: #{actor_sac_forward.1} parent=55 // loop_header_branch
                %275 = sbr.rel (%p273) target = $region63
              $region60: #{actor_sac_forward.1} parent=55 // loop_body
                %v279 = vld [vmem:[%s277] sm:$0xff]
                %280 = vst [vmem:[%s278] sm:$0xff] %v279
                %v281 = vld [vmem:[%s277 + $0x10] sm:$0xff]
                %282 = vst [vmem:[%s278 + $0x8] sm:$0xff] %v281
              $region61: #{actor_sac_forward.1} parent=55 // loop_footer
                %s276 = sadd.s32 1, %s272
              $region62: #{actor_sac_forward.1} parent=55 // loop_footer_branch
                %271 = sbr.rel target = $region58
              $region63: #{actor_sac_forward.1} parent=55 // loop_exit
                _
            $region56: #{actor_sac_forward.1} parent=47 // pred_fallthru
              _
          $region48: #{actor_sac_forward.1} parent=43 // pred_fallthru
            _
          %299 = vnop
        $region44: #{actor_sac_forward.1} parent=39 // pred_fallthru
          _
        // Predicated region
        $region79: #{actor_sac_forward.1} parent=39 // pred_check
          %p300 = pneg %p60
        $region80: #{actor_sac_forward.1} parent=39 // pred_check_branch
          %302 = sbr.rel (%p300) target = $region82
        $region81: #{actor_sac_forward.1} parent=39 // pred_region
          %p303 = scmp.lt.s32.totalorder %s14, 1
          %s304 = scalar_select %p303, %s14, 1
          %s305 = smul.addr %s304, 4
          %s306 = scalar_lea.vmem %s1, %s305
        $region82: #{actor_sac_forward.1} parent=39 // pred_fallthru
          _
      $region40: #{actor_sac_forward.1} parent=5 // pred_fallthru
        _
      %p307 = scmp.le.s32.totalorder 1, %s14
      %p308 = scmp.lt.s32.totalorder %s14, 3
      %p309 = pnand %p307, %p308
      %p310 = pneg %p309
      // Predicated region
      $region83: #{actor_sac_forward.1} parent=5 // pred_check
        _
      $region84: #{actor_sac_forward.1} parent=5 // pred_check_branch
        %312 = sbr.rel (%p309) target = $region86
      $region85: #{actor_sac_forward.1} parent=5 // pred_region
        %s313 = ssub.s32 %s14, 1
        %s314 = sand.u32 %s27, 1
        %s315 = sand.u32 %s27, 1
        %s316 = smul.addr %s315, 16
        %s317 = scalar_lea.vmem [#allocation2], %s316
        // Predicated region
        $region87: #{actor_sac_forward.1} parent=85 // pred_check
          %p318 = pneg %p40
        $region88: #{actor_sac_forward.1} parent=85 // pred_check_branch
          %320 = sbr.rel (%p318) target = $region90
        $region89: #{actor_sac_forward.1} parent=85 // pred_region
          _
        $region90: #{actor_sac_forward.1} parent=85 // pred_fallthru
          _
        %s321 = sand.u32 %s27, 1
        %s322 = sand.u32 %s27, 1
        %s323 = smul.addr %s322, 16
        %s324 = scalar_lea.vmem [#allocation2], %s323
        %p325 = pneg %p40
        %p326 = pneg %p37
        %p327 = scmp.lt.s32.totalorder %s19, 1
        %s328 = scalar_select %p327, %s19, 1
        %s329 = smul.addr %s328, 4
        %s330 = scalar_lea.vmem %s1, %s329
        %p331 = pneg %p66
        %p332 = pneg %p63
        %p333 = pneg %p87
        %p334 = pneg %p84
        %p335 = pneg %p108
        %p336 = pneg %p105
        %p337 = pneg %p129
        %p338 = pneg %p126
        %p339 = pneg %p150
        %p340 = pneg %p147
        %p341 = pneg %p171
        %p342 = pneg %p168
        %p343 = pneg %p192
        %p344 = pneg %p189
        %p345 = pneg %p218
        %p346 = pneg %p215
        %p347 = scmp.lt.s32.totalorder %s19, 1
        %s348 = scalar_select %p347, %s19, 1
        %s349 = smul.addr %s348, 8
        %s350 = scalar_lea.vmem %s8, %s349
        %p351 = scmp.lt.s32.totalorder %s19, 1
        %s352 = scalar_select %p351, %s19, 1
        %s353 = smul.addr %s352, 4
        %s354 = scalar_lea.vmem %s1, %s353
        %p355 = scmp.lt.s32.totalorder %s19, 1
        %s356 = scalar_select %p355, %s19, 1
        %s357 = smul.addr %s356, 8
        %s358 = scalar_lea.vmem %s8, %s357
        %v359 = vld [vmem:[%s317] sm:$0xff]
        %v360 = vld [vmem:[%s317 + $0x8] sm:$0xff]
        %v361 = vld [vmem:[%s2] sm:$0xff]
        %v362 = vld [vmem:[%s2 + $0x8] sm:$0xff]
        %v363 = vld [vmem:[%s2 + $0x10] sm:$0xff]
        %v364 = vld [vmem:[%s2 + $0x18] sm:$0xff]
        %v365 = vld [vmem:[%s3] sm:$0xff]
        %v366 = vld [vmem:[%s3 + $0x8] sm:$0xff]
        %v367 = vld [vmem:[%s3 + $0x10] sm:$0xff]
        %v368 = vld [vmem:[%s3 + $0x18] sm:$0xff]
        %370 = vset.pattern.permute.xlu0 0
        %371 = vperm.xlu0 %370, %v365
        %v372 = vpop.permute.xlu0 %371
        %375 = vset.pattern.permute.xlu0 0
        %376 = vperm.xlu0 %375, %v366
        %v377 = vpop.permute.xlu0 %376
        %380 = vset.pattern.permute.xlu0 0
        %381 = vperm.xlu0 %380, %v367
        %v382 = vpop.permute.xlu0 %381
        %385 = vset.pattern.permute.xlu0 0
        %386 = vperm.xlu0 %385, %v368
        %v387 = vpop.permute.xlu0 %386
        %vm389 = vcmask 130048
        %v391 = vsel %vm389, %v361, 0
        %v394 = vsel %vm389, %v362, 0
        %v397 = vsel %vm389, %v363, 0
        %v400 = vsel %vm389, %v364, 0
        %402 = vmatprep.subr.mxu0 0.0
        %403 = vmatpush1.msra.mxu0 %v359
        %404 = vmatprep.subr.mxu0 0.0
        %405 = vmatpush1.msra.mxu0 %v360
        %406 = vmatprep.subr.mxu0 0.0
        %407 = vmatpush1.msra.mxu0 0.0
        %408 = vmatprep.subr.mxu0 0.0
        %409 = vmatpush1.msra.mxu0 0.0
        %410 = vmatprep.subr.mxu0 0.0
        %411 = vmatpush1.msra.mxu0 0.0
        %412 = vmatprep.subr.mxu0 0.0
        %413 = vmatpush1.msra.mxu0 0.0
        %414 = vmatprep.subr.mxu0 0.0
        %415 = vmatpush1.msra.mxu0 0.0
        %416 = vmatprep.subr.mxu0 0.0
        %417 = vmatpush1.msra.mxu0 0.0
        %418 = vmatprep.subr.mxu0 0.0
        %419 = vmatpush1.msra.mxu0 0.0
        %420 = vmatprep.subr.mxu0 0.0
        %421 = vmatpush1.msra.mxu0 0.0
        %422 = vmatprep.subr.mxu0 0.0
        %423 = vmatpush1.msra.mxu0 0.0
        %424 = vmatprep.subr.mxu0 0.0
        %425 = vmatpush1.msra.mxu0 0.0
        %426 = vmatprep.subr.mxu0 0.0
        %427 = vmatpush1.msra.mxu0 0.0
        %428 = vmatprep.subr.mxu0 0.0
        %429 = vmatpush1.msra.mxu0 0.0
        %430 = vmatprep.subr.mxu0 0.0
        %431 = vmatpush1.msra.mxu0 0.0
        %432 = vmatprep.subr.mxu0 0.0
        %433 = vmatpush1.msra.mxu0 0.0
        %434 = vmatprep.subr.mxu0 0.0
        %435 = vmatpush1.msra.mxu0 0.0
        %436 = vmatprep.subr.mxu0 0.0
        %437 = vmatpush1.msra.mxu0 0.0
        %438 = vmatprep.subr.mxu0 0.0
        %439 = vmatpush1.msra.mxu0 0.0
        %440 = vmatprep.subr.mxu0 0.0
        %441 = vmatpush1.msra.mxu0 0.0
        %442 = vmatprep.subr.mxu0 0.0
        %443 = vmatpush1.msra.mxu0 0.0
        %444 = vmatprep.subr.mxu0 0.0
        %445 = vmatpush1.msra.mxu0 0.0
        %446 = vmatprep.subr.mxu0 0.0
        %447 = vmatpush1.msra.mxu0 0.0
        %448 = vmatprep.subr.mxu0 0.0
        %449 = vmatpush1.msra.mxu0 0.0
        %450 = vmatprep.subr.mxu0 0.0
        %451 = vmatpush1.msra.mxu0 0.0
        %452 = vmatprep.subr.mxu0 0.0
        %453 = vmatpush1.msra.mxu0 0.0
        %454 = vmatprep.subr.mxu0 0.0
        %455 = vmatpush1.msra.mxu0 0.0
        %456 = vmatprep.subr.mxu0 0.0
        %457 = vmatpush1.msra.mxu0 0.0
        %458 = vmatprep.subr.mxu0 0.0
        %459 = vmatpush1.msra.mxu0 0.0
        %460 = vmatprep.subr.mxu0 0.0
        %461 = vmatpush1.msra.mxu0 0.0
        %462 = vmatprep.subr.mxu0 0.0
        %463 = vmatpush1.msra.mxu0 0.0
        %464 = vmatprep.subr.mxu0 0.0
        %465 = vmatpush1.msra.mxu0 0.0
        %466 = vmatprep.mubr.f32.mxu0 0.0
        %467 = vmatmul.mubr.f32.gmra.mrb[0].mxu0 %v391
        %v468 = vpop.f32.mrb[0].mxu0
        %v469 = vadd.f32 %v372, %v468
        %v470 = vpop.f32.mrb[0].mxu0
        %471 = vmatprep.mubr.f32.mxu0 0.0
        %472 = vmatmul.mubr.f32.gmra.mrb[0].mxu0 %v394
        %v473 = vpop.f32.mrb[0].mxu0
        %v474 = vadd.f32 %v377, %v473
        %v475 = vpop.f32.mrb[0].mxu0
        %476 = vmatprep.mubr.f32.mxu0 0.0
        %477 = vmatmul.mubr.f32.gmra.mrb[0].mxu0 %v397
        %v478 = vpop.f32.mrb[0].mxu0
        %v479 = vadd.f32 %v382, %v478
        %v480 = vpop.f32.mrb[0].mxu0
        %481 = vmatprep.mubr.f32.mxu0 0.0
        %482 = vmatmul.mubr.f32.gmra.mrb[0].mxu0 %v400
        %v483 = vpop.f32.mrb[0].mxu0
        %v484 = vadd.f32 %v387, %v483
        %v485 = vpop.f32.mrb[0].mxu0
        %486 = vdwg.mxu0
        %v487 = vmax.f32 %v469, 0.0
        %v488 = vmax.f32 %v474, 0.0
        %v489 = vmax.f32 %v479, 0.0
        %v490 = vmax.f32 %v484, 0.0
        %v491 = vld [vmem:[%s4] sm:$0xff]
        %v492 = vld [vmem:[%s4 + $0x8] sm:$0xff]
        %v493 = vld [vmem:[%s4 + $0x10] sm:$0xff]
        %v494 = vld [vmem:[%s4 + $0x18] sm:$0xff]
        %v495 = vld [vmem:[%s5] sm:$0xff]
        %v496 = vld [vmem:[%s5 + $0x8] sm:$0xff]
        %v497 = vld [vmem:[%s5 + $0x10] sm:$0xff]
        %v498 = vld [vmem:[%s5 + $0x18] sm:$0xff]
        %500 = vset.pattern.permute.xlu0 0
        %501 = vperm.xlu0 %500, %v495
        %v502 = vpop.permute.xlu0 %501
        %505 = vset.pattern.permute.xlu0 0
        %506 = vperm.xlu0 %505, %v496
        %v507 = vpop.permute.xlu0 %506
        %510 = vset.pattern.permute.xlu0 0
        %511 = vperm.xlu0 %510, %v497
        %v512 = vpop.permute.xlu0 %511
        %515 = vset.pattern.permute.xlu0 0
        %516 = vperm.xlu0 %515, %v498
        %v517 = vpop.permute.xlu0 %516
        %vm519 = vcmask 261120
        %v521 = vsel %vm519, %v491, 0
        %v524 = vsel %vm519, %v492, 0
        %v527 = vsel %vm519, %v493, 0
        %v530 = vsel %vm519, %v494, 0
        %532 = vmatprep.subr.mxu0 0.0
        %533 = vmatpush1.msra.mxu0 %v487
        %534 = vmatprep.subr.mxu0 0.0
        %535 = vmatpush1.msra.mxu0 %v488
        %536 = vmatprep.subr.mxu0 0.0
        %537 = vmatpush1.msra.mxu0 %v489
        %538 = vmatprep.subr.mxu0 0.0
        %539 = vmatpush1.msra.mxu0 %v490
        %540 = vmatprep.subr.mxu0 0.0
        %541 = vmatpush1.msra.mxu0 0.0
        %542 = vmatprep.subr.mxu0 0.0
        %543 = vmatpush1.msra.mxu0 0.0
        %544 = vmatprep.subr.mxu0 0.0
        %545 = vmatpush1.msra.mxu0 0.0
        %546 = vmatprep.subr.mxu0 0.0
        %547 = vmatpush1.msra.mxu0 0.0
        %548 = vmatprep.subr.mxu0 0.0
        %549 = vmatpush1.msra.mxu0 0.0
        %550 = vmatprep.subr.mxu0 0.0
        %551 = vmatpush1.msra.mxu0 0.0
        %552 = vmatprep.subr.mxu0 0.0
        %553 = vmatpush1.msra.mxu0 0.0
        %554 = vmatprep.subr.mxu0 0.0
        %555 = vmatpush1.msra.mxu0 0.0
        %556 = vmatprep.subr.mxu0 0.0
        %557 = vmatpush1.msra.mxu0 0.0
        %558 = vmatprep.subr.mxu0 0.0
        %559 = vmatpush1.msra.mxu0 0.0
        %560 = vmatprep.subr.mxu0 0.0
        %561 = vmatpush1.msra.mxu0 0.0
        %562 = vmatprep.subr.mxu0 0.0
        %563 = vmatpush1.msra.mxu0 0.0
        %564 = vmatprep.subr.mxu0 0.0
        %565 = vmatpush1.msra.mxu0 0.0
        %566 = vmatprep.subr.mxu0 0.0
        %567 = vmatpush1.msra.mxu0 0.0
        %568 = vmatprep.subr.mxu0 0.0
        %569 = vmatpush1.msra.mxu0 0.0
        %570 = vmatprep.subr.mxu0 0.0
        %571 = vmatpush1.msra.mxu0 0.0
        %572 = vmatprep.subr.mxu0 0.0
        %573 = vmatpush1.msra.mxu0 0.0
        %574 = vmatprep.subr.mxu0 0.0
        %575 = vmatpush1.msra.mxu0 0.0
        %576 = vmatprep.subr.mxu0 0.0
        %577 = vmatpush1.msra.mxu0 0.0
        %578 = vmatprep.subr.mxu0 0.0
        %579 = vmatpush1.msra.mxu0 0.0
        %580 = vmatprep.subr.mxu0 0.0
        %581 = vmatpush1.msra.mxu0 0.0
        %582 = vmatprep.subr.mxu0 0.0
        %583 = vmatpush1.msra.mxu0 0.0
        %584 = vmatprep.subr.mxu0 0.0
        %585 = vmatpush1.msra.mxu0 0.0
        %586 = vmatprep.subr.mxu0 0.0
        %587 = vmatpush1.msra.mxu0 0.0
        %588 = vmatprep.subr.mxu0 0.0
        %589 = vmatpush1.msra.mxu0 0.0
        %590 = vmatprep.subr.mxu0 0.0
        %591 = vmatpush1.msra.mxu0 0.0
        %592 = vmatprep.subr.mxu0 0.0
        %593 = vmatpush1.msra.mxu0 0.0
        %594 = vmatprep.subr.mxu0 0.0
        %595 = vmatpush1.msra.mxu0 0.0
        %596 = vmatprep.mubr.f32.mxu0 0.0
        %597 = vmatmul.mubr.f32.gmra.mrb[0].mxu0 %v521
        %v598 = vpop.f32.mrb[0].mxu0
        %v599 = vadd.f32 %v502, %v598
        %v600 = vpop.f32.mrb[0].mxu0
        %601 = vmatprep.mubr.f32.mxu0 0.0
        %602 = vmatmul.mubr.f32.gmra.mrb[0].mxu0 %v524
        %v603 = vpop.f32.mrb[0].mxu0
        %v604 = vadd.f32 %v507, %v603
        %v605 = vpop.f32.mrb[0].mxu0
        %606 = vmatprep.mubr.f32.mxu0 0.0
        %607 = vmatmul.mubr.f32.gmra.mrb[0].mxu0 %v527
        %v608 = vpop.f32.mrb[0].mxu0
        %v609 = vadd.f32 %v512, %v608
        %v610 = vpop.f32.mrb[0].mxu0
        %611 = vmatprep.mubr.f32.mxu0 0.0
        %612 = vmatmul.mubr.f32.gmra.mrb[0].mxu0 %v530
        %v613 = vpop.f32.mrb[0].mxu0
        %v614 = vadd.f32 %v517, %v613
        %v615 = vpop.f32.mrb[0].mxu0
        %616 = vdwg.mxu0
        %v617 = vmax.f32 %v599, 0.0
        %v618 = vmax.f32 %v604, 0.0
        %v619 = vmax.f32 %v609, 0.0
        %v620 = vmax.f32 %v614, 0.0
        %v621 = vld [vmem:[%s6] sm:$0xff]
        %v622 = vld [vmem:[%s7] sm:$0xff]
        %624 = vset.pattern.permute.xlu0 0
        %625 = vperm.xlu0 %624, %v622
        %v626 = vpop.permute.xlu0 %625
        %v629 = vsel %vm519, %v621, 0
        %631 = vmatprep.subr.mxu0 0.0
        %632 = vmatpush1.msra.mxu0 %v617
        %633 = vmatprep.subr.mxu0 0.0
        %634 = vmatpush1.msra.mxu0 %v618
        %635 = vmatprep.subr.mxu0 0.0
        %636 = vmatpush1.msra.mxu0 %v619
        %637 = vmatprep.subr.mxu0 0.0
        %638 = vmatpush1.msra.mxu0 %v620
        %639 = vmatprep.subr.mxu0 0.0
        %640 = vmatpush1.msra.mxu0 0.0
        %641 = vmatprep.subr.mxu0 0.0
        %642 = vmatpush1.msra.mxu0 0.0
        %643 = vmatprep.subr.mxu0 0.0
        %644 = vmatpush1.msra.mxu0 0.0
        %645 = vmatprep.subr.mxu0 0.0
        %646 = vmatpush1.msra.mxu0 0.0
        %647 = vmatprep.subr.mxu0 0.0
        %648 = vmatpush1.msra.mxu0 0.0
        %649 = vmatprep.subr.mxu0 0.0
        %650 = vmatpush1.msra.mxu0 0.0
        %651 = vmatprep.subr.mxu0 0.0
        %652 = vmatpush1.msra.mxu0 0.0
        %653 = vmatprep.subr.mxu0 0.0
        %654 = vmatpush1.msra.mxu0 0.0
        %655 = vmatprep.subr.mxu0 0.0
        %656 = vmatpush1.msra.mxu0 0.0
        %657 = vmatprep.subr.mxu0 0.0
        %658 = vmatpush1.msra.mxu0 0.0
        %659 = vmatprep.subr.mxu0 0.0
        %660 = vmatpush1.msra.mxu0 0.0
        %661 = vmatprep.subr.mxu0 0.0
        %662 = vmatpush1.msra.mxu0 0.0
        %663 = vmatprep.subr.mxu0 0.0
        %664 = vmatpush1.msra.mxu0 0.0
        %665 = vmatprep.subr.mxu0 0.0
        %666 = vmatpush1.msra.mxu0 0.0
        %667 = vmatprep.subr.mxu0 0.0
        %668 = vmatpush1.msra.mxu0 0.0
        %669 = vmatprep.subr.mxu0 0.0
        %670 = vmatpush1.msra.mxu0 0.0
        %671 = vmatprep.subr.mxu0 0.0
        %672 = vmatpush1.msra.mxu0 0.0
        %673 = vmatprep.subr.mxu0 0.0
        %674 = vmatpush1.msra.mxu0 0.0
        %675 = vmatprep.subr.mxu0 0.0
        %676 = vmatpush1.msra.mxu0 0.0
        %677 = vmatprep.subr.mxu0 0.0
        %678 = vmatpush1.msra.mxu0 0.0
        %679 = vmatprep.subr.mxu0 0.0
        %680 = vmatpush1.msra.mxu0 0.0
        %681 = vmatprep.subr.mxu0 0.0
        %682 = vmatpush1.msra.mxu0 0.0
        %683 = vmatprep.subr.mxu0 0.0
        %684 = vmatpush1.msra.mxu0 0.0
        %685 = vmatprep.subr.mxu0 0.0
        %686 = vmatpush1.msra.mxu0 0.0
        %687 = vmatprep.subr.mxu0 0.0
        %688 = vmatpush1.msra.mxu0 0.0
        %689 = vmatprep.subr.mxu0 0.0
        %690 = vmatpush1.msra.mxu0 0.0
        %691 = vmatprep.subr.mxu0 0.0
        %692 = vmatpush1.msra.mxu0 0.0
        %693 = vmatprep.subr.mxu0 0.0
        %694 = vmatpush1.msra.mxu0 0.0
        %695 = vmatprep.mubr.f32.mxu0 0.0
        %696 = vmatmul.mubr.f32.gmra.mrb[0].mxu0 %v629
        %v697 = vpop.f32.mrb[0].mxu0
        %v698 = vadd.f32 %v626, %v697
        %v699 = vpop.f32.mrb[0].mxu0
        %700 = vdwg.mxu0
        %v701 = vmax.f32 %v698, -20.0
        %v702 = vmin.f32 %v701, 2.0
        %v703 = vld [vmem:[%s354] sm:$0xf]
        %v704 = vmul.f32 %v702, 1.442695
        %v705 = vpow.pop %v704
        %v707 = vrot.slane %v703, 4
        %v709 = vmul.f32 %v705, %v707
        %v711 = vrot.slane %v709, 4
        %v713 = vadd.f32 %v698, %v711
        %v714 = vtanh.pop %v713
        %v715 = vmul.f32 %v703, %v703
        %v716 = vmul.f32 %v715, -0.5
        %v718 = vrot.slane %v702, 4
        %v720 = vsub.f32 %v716, %v718
        %v721 = vsub.f32 %v720, 0.9189385
        %v722 = vmul.f32 %v714, %v714
        %v723 = vsub.f32 1.0, %v722
        %v724 = vadd.f32 %v723, 1e-07
        %v725 = vlog2.pop %v724
        %v726 = vmul.f32 %v725, 0.6931472
        %v727 = vsub.f32 %v721, %v726
        %vm728 = vcmask 1043456
        %v729 = vsel %vm728, %v727, 0.0
        %v730 = vrot.slane %v729, 4
        %v731 = vadd.f32 %v729, %v730
        %v732 = vrot.slane %v731, 2
        %v733 = vadd.f32 %v731, %v732
        %v734 = vrot.slane %v733, 1
        %v735 = vadd.f32 %v733, %v734
        %v736 = vmul.f32 %v714, 2.0
        %737 = vst [vmem:[%s358] sm:$0xf] %v736
        %738 = vst [vmem:[%s358 + $0x4] sm:$0x1] %v735
        %p739 = scmp.lt.s32.totalorder %s19, 1
        %s740 = scalar_select %p739, %s19, 1
        %s741 = smul.addr %s740, 8
        %s742 = scalar_lea.vmem %s8, %s741
        // Predicated region
        $region91: #{actor_sac_forward.1} parent=85 // pred_check
          %p743 = pneg %p215
        $region92: #{actor_sac_forward.1} parent=85 // pred_check_branch
          %745 = sbr.rel (%p743) target = $region94
        $region93: #{actor_sac_forward.1} parent=85 // pred_region
          _
        $region94: #{actor_sac_forward.1} parent=85 // pred_fallthru
          _
      $region86: #{actor_sac_forward.1} parent=5 // pred_fallthru
        _
      %p746 = scmp.le.s32.totalorder 2, %s14
      // Predicated region
      $region95: #{actor_sac_forward.1} parent=5 // pred_check
        %p747 = pneg %p746
      $region96: #{actor_sac_forward.1} parent=5 // pred_check_branch
        %749 = sbr.rel (%p747) target = $region98
      $region97: #{actor_sac_forward.1} parent=5 // pred_region
        %s750 = ssub.s32 %s14, 2
        // Predicated region
        $region99: #{actor_sac_forward.1} parent=97 // pred_check
          %p751 = pneg %p221
        $region100: #{actor_sac_forward.1} parent=97 // pred_check_branch
          %753 = sbr.rel (%p751) target = $region102
        $region101: #{actor_sac_forward.1} parent=97 // pred_region
          %p754 = scmp.lt.s32.totalorder %s20, 1
          %s755 = scalar_select %p754, %s20, 1
          %s756 = smul.addr %s755, 8
          %s757 = scalar_lea.vmem %s8, %s756
        $region102: #{actor_sac_forward.1} parent=97 // pred_fallthru
          _
      $region98: #{actor_sac_forward.1} parent=5 // pred_fallthru
        _
    $region6: #{actor_sac_forward.1} parent=1 // loop_footer
      %s18 = sadd.s32 1, %s14
    $region7: #{actor_sac_forward.1} parent=1 // loop_footer_branch
      %13 = sbr.rel target = $region3
    $region8: #{actor_sac_forward.1} parent=1 // loop_exit
      _

</llo_original>
